<compile_context>
chip_gen: v7x
topology: tpu7x:2x2x1
jax: 0.10.0
libtpu: 0.0.40
codegen_flags: <defaults>
</compile_context>

<pallas_src>
import jax
import jax.numpy as jnp
from jax import lax
from jax.experimental import pallas as pl
from jax.experimental.pallas import tpu as pltpu

EMBED_LEN = 50
HIDDEN_DIM = 50
N_CLASSES = 9          # len(target_classes)
VOCAB_SIZE = 100       # stand-in for len(vocab1) + len(vocab2)

HP = 128               # hidden dim padded to lane width (MXU contraction dim)
CP = 128               # class dim padded to lane width (lane-dense output)
BB = 8                 # batch block (sublane-aligned rows per MXU push)


def rnn_classifier_kernel(xproj_ref,  # (TT, BB, HP) f32: emb @ W_ih^T + b_ih + b_hh (padded)
                          h0_ref,     # (BB, HP)     f32: initial hidden state (padded)
                          whh_ref,    # (HP, HP)     bf16: W_hh^T (zero-padded)
                          wl_ref,     # (HP, CP)     bf16: W_linear^T (zero-padded)
                          bl_ref,     # (1, CP)      f32: b_linear (zero-padded)
                          out_ref,    # (BB, CP)     f32: padded logits
                          h_scr,      # (BB, HP)     f32 VMEM scratch: h carried over T blocks
                          ):
    t_blk = pl.program_id(1)

    @pl.when(t_blk == 0)
    def _():
        h_scr[...] = h0_ref[...]

    whh = whh_ref[...]                 # hoist weight load out of the time loop
    TT = xproj_ref.shape[0]

    def step(i, h):
        # Single matmul on the serial dependency chain; input projection and
        # biases already folded into xproj.  h stays in vregs across the
        # (short, unrolled) block loop; bf16 operands, f32 accumulation.
        pre = xproj_ref[i] + jnp.dot(h.astype(jnp.bfloat16), whh,
                                     preferred_element_type=jnp.float32)
        return jnp.tanh(pre)           # nn.RNN default nonlinearity

    h = lax.fori_loop(0, TT, step, h_scr[...], unroll=True)
    h_scr[...] = h                     # carry to the next time block

    @pl.when(t_blk == pl.num_programs(1) - 1)
    def _():
        # Linear head on the last hidden state (== output[:, -1] for 1 layer).
        out_ref[...] = (jnp.dot(h.astype(jnp.bfloat16), wl_ref[...],
                                preferred_element_type=jnp.float32)
                        + bl_ref[...])


def rnn_classifier_forward(x_idx, params):
    """x_idx: (B, T) int32 token ids. Returns (B, N_CLASSES) float32 logits."""
    emb_table, w_ih, w_hh, b_ih, b_hh, w_lin, b_lin, h0 = params
    B, T = x_idx.shape
    H = w_hh.shape[0]
    C = w_lin.shape[0]

    # Sublane-align the batch.
    Bp = pl.cdiv(B, BB) * BB
    # Time block: must divide T exactly (no zero-padded timesteps allowed on a
    # tanh recurrence).
    TT = next(c for c in (8, 4, 2, 1) if T % c == 0)

    # --- glue (plain JAX) -------------------------------------------------
    # Time-major embedding gather fused with the hoisted input projection.
    # w_ih is zero-padded to HP output lanes ONCE, the big (T*B,E)@(E,HP)
    # matmul runs in bf16 with f32 accumulation, and its result is already
    # lane-padded -> no post-hoc pad of a (T,B,HP) f32 slab.
    emb_tm = jnp.take(emb_table, x_idx.T, axis=0)                  # (T, B, E)
    w_ih_p = jnp.pad(w_ih, ((0, HP - H), (0, 0)))                  # (HP, E)
    bias_p = jnp.pad(b_ih + b_hh, (0, HP - H))                     # (HP,)
    x_proj = jnp.einsum('tbe,he->tbh',
                        emb_tm.astype(jnp.bfloat16),
                        w_ih_p.astype(jnp.bfloat16),
                        preferred_element_type=jnp.float32) + bias_p  # (T, B, HP) f32
    x_proj = jnp.pad(x_proj, ((0, 0), (0, Bp - B), (0, 0)))        # (T, Bp, HP)

    h0_p = jnp.pad(h0, ((0, Bp - B), (0, HP - H)))                 # (Bp, HP)
    whh_p = jnp.pad(w_hh.T, ((0, HP - H), (0, HP - H))).astype(jnp.bfloat16)
    wl_p = jnp.pad(w_lin.T, ((0, HP - H), (0, CP - C))).astype(jnp.bfloat16)
    bl_p = jnp.pad(b_lin, (0, CP - C))[None, :]                    # (1, CP)
    # Zero padding is exact: padded hidden lanes see zero pre-activation every
    # step (tanh(0) == 0) and padded W_hh rows/cols only ever multiply zeros.

    grid = (Bp // BB, T // TT)
    out_p = pl.pallas_call(
        rnn_classifier_kernel,
        out_shape=jax.ShapeDtypeStruct((Bp, CP), jnp.float32),
        grid_spec=pltpu.PrefetchScalarGridSpec(
            num_scalar_prefetch=0,
            grid=grid,
            in_specs=[
                pl.BlockSpec((TT, BB, HP), lambda b, t: (t, b, 0)),   # x_proj stream
                pl.BlockSpec((BB, HP), lambda b, t: (b, 0)),          # h0
                pl.BlockSpec((HP, HP), lambda b, t: (0, 0)),          # W_hh^T (resident)
                pl.BlockSpec((HP, CP), lambda b, t: (0, 0)),          # W_lin^T (resident)
                pl.BlockSpec((1, CP), lambda b, t: (0, 0)),           # b_lin
            ],
            out_specs=pl.BlockSpec((BB, CP), lambda b, t: (b, 0)),
            scratch_shapes=[pltpu.VMEM((BB, HP), jnp.float32)],       # h carry
        ),
        compiler_params=pltpu.CompilerParams(
            dimension_semantics=("parallel", "arbitrary")),
    )(x_proj, h0_p, whh_p, wl_p, bl_p)

    return out_p[:B, :C]


def reference_forward(x_idx, params):
    """Pure-JAX f32 reference mirroring PyTorch nn.RNN semantics."""
    emb_table, w_ih, w_hh, b_ih, b_hh, w_lin, b_lin, h0 = params
    emb = jnp.take(emb_table, x_idx, axis=0)          # (B, T, E)
    h = h0
    for t in range(emb.shape[1]):
        h = jnp.tanh(emb[:, t, :] @ w_ih.T + b_ih + h @ w_hh.T + b_hh)
    return h @ w_lin.T + b_lin


if __name__ == "__main__":
    B, T = 2, 8
    key = jax.random.PRNGKey(0)
    keys = jax.random.split(key, 9)

    # Deterministic synthetic parameters (shapes follow the module's __init__).
    emb_table = jax.random.normal(keys[0], (VOCAB_SIZE, EMBED_LEN), jnp.float32) * 0.1
    w_ih = jax.random.normal(keys[1], (HIDDEN_DIM, EMBED_LEN), jnp.float32) * 0.1
    w_hh = jax.random.normal(keys[2], (HIDDEN_DIM, HIDDEN_DIM), jnp.float32) * 0.1
    b_ih = jax.random.normal(keys[3], (HIDDEN_DIM,), jnp.float32) * 0.1
    b_hh = jax.random.normal(keys[4], (HIDDEN_DIM,), jnp.float32) * 0.1
    w_lin = jax.random.normal(keys[5], (N_CLASSES, HIDDEN_DIM), jnp.float32) * 0.1
    b_lin = jax.random.normal(keys[6], (N_CLASSES,), jnp.float32) * 0.1
    # PyTorch draws h0 = torch.randn(1, B, H) at forward time; here it is a
    # deterministic draw (squeezed to (B, H)).
    h0 = jax.random.normal(keys[7], (B, HIDDEN_DIM), jnp.float32)

    x_idx = jax.random.randint(keys[8], (B, T), 0, VOCAB_SIZE, jnp.int32)

    params = (emb_table, w_ih, w_hh, b_ih, b_hh, w_lin, b_lin, h0)

    logits = rnn_classifier_forward(x_idx, params)
    logits = jax.block_until_ready(logits)

    ref = reference_forward(x_idx, params)
    assert logits.shape == (B, N_CLASSES)
    # Tolerance loosened vs. the f32 reference because the input projection,
    # recurrent, and head matmuls feed the MXU in bf16 (f32 accumulation).
    assert jnp.allclose(logits, ref, atol=5e-2, rtol=5e-2), "mismatch vs reference"

    print("KERNEL_OK")
</pallas_src>

<mosaic_0001>
module attributes {stable_mosaic.version = 11 : i64} {
  func.func @rnn_classifier_kernel(%arg0: i32, %arg1: i32, %arg2: memref<8x8x128xf32, #tpu.memory_space<vmem>>, %arg3: memref<8x128xf32, #tpu.memory_space<vmem>>, %arg4: memref<128x128xbf16, #tpu.memory_space<vmem>>, %arg5: memref<128x128xbf16, #tpu.memory_space<vmem>>, %arg6: memref<1x128xf32, #tpu.memory_space<vmem>>, %arg7: memref<8x128xf32, #tpu.memory_space<vmem>>, %arg8: memref<8x128xf32, #tpu.memory_space<vmem>>) attributes {dimension_semantics = [#tpu.dimension_semantics<parallel>, #tpu.dimension_semantics<arbitrary>], iteration_bounds = array<i64: 1, 1>, scalar_prefetch = 0 : i64, scratch_operands = 1 : i64, tpu.core_type = #tpu.core_type<tc>, window_params = [{transform_indices = @transform_0, window_bounds = array<i64: 8, 8, 128>}, {transform_indices = @transform_1, window_bounds = array<i64: 8, 128>}, {pipeline_mode = #tpu.pipeline_mode<synchronous>, transform_indices = @transform_2, window_bounds = array<i64: 128, 128>}, {pipeline_mode = #tpu.pipeline_mode<synchronous>, transform_indices = @transform_3, window_bounds = array<i64: 128, 128>}, {pipeline_mode = #tpu.pipeline_mode<synchronous>, transform_indices = @transform_4, window_bounds = array<i64: 1, 128>}, {transform_indices = @transform_5, window_bounds = array<i64: 8, 128>}]} {
    %c0_i32 = arith.constant 0 : i32
    %0 = arith.cmpi eq, %arg1, %c0_i32 : i32
    %1 = arith.extui %0 : i1 to i32
    %c0_i32_0 = arith.constant 0 : i32
    %2 = arith.cmpi ne, %1, %c0_i32_0 : i32
    scf.if %2 {
      %c0_32 = arith.constant 0 : index
      %c0_33 = arith.constant 0 : index
      %65 = vector.load %arg3[%c0_32, %c0_33] : memref<8x128xf32, #tpu.memory_space<vmem>>, vector<8x128xf32>
      %c0_34 = arith.constant 0 : index
      %c0_35 = arith.constant 0 : index
      %66 = vector.load %arg8[%c0_34, %c0_35] : memref<8x128xf32, #tpu.memory_space<vmem>>, vector<8x128xf32>
      tpu.vector_store %arg8[%c0_34, %c0_35], %65 {strides = array<i32>} : memref<8x128xf32, #tpu.memory_space<vmem>>, vector<8x128xf32>,
    } else {
    }
    %c0 = arith.constant 0 : index
    %c0_1 = arith.constant 0 : index
    %3 = vector.load %arg4[%c0, %c0_1] : memref<128x128xbf16, #tpu.memory_space<vmem>>, vector<128x128xbf16>
    %c0_2 = arith.constant 0 : index
    %c0_3 = arith.constant 0 : index
    %4 = vector.load %arg8[%c0_2, %c0_3] : memref<8x128xf32, #tpu.memory_space<vmem>>, vector<8x128xf32>
    %c0_i32_4 = arith.constant 0 : i32
    %5 = arith.index_cast %c0_i32_4 : i32 to index
    %c0_5 = arith.constant 0 : index
    %c0_6 = arith.constant 0 : index
    %6 = vector.load %arg2[%5, %c0_5, %c0_6] : memref<8x8x128xf32, #tpu.memory_space<vmem>>, vector<1x8x128xf32>
    %7 = vector.shape_cast %6 : vector<1x8x128xf32> to vector<8x128xf32>
    %8 = arith.truncf %4 : vector<8x128xf32> to vector<8x128xbf16>
    %cst = arith.constant dense<0.000000e+00> : vector<8x128xf32>
    %9 = tpu.matmul %8, %3, %cst {dimension_numbers = #tpu.dot_dimension_numbers<[1], [0], [0], [1], [0, 0, 1, 1], [], []>} : vector<8x128xbf16>, vector<128x128xbf16>, vector<8x128xf32> -> vector<8x128xf32>
    %10 = arith.addf %7, %9 : vector<8x128xf32>
    %11 = math.tanh %10 : vector<8x128xf32>
    %c1_i32 = arith.constant 1 : i32
    %12 = arith.index_cast %c1_i32 : i32 to index
    %c0_7 = arith.constant 0 : index
    %c0_8 = arith.constant 0 : index
    %13 = vector.load %arg2[%12, %c0_7, %c0_8] : memref<8x8x128xf32, #tpu.memory_space<vmem>>, vector<1x8x128xf32>
    %14 = vector.shape_cast %13 : vector<1x8x128xf32> to vector<8x128xf32>
    %15 = arith.truncf %11 : vector<8x128xf32> to vector<8x128xbf16>
    %cst_9 = arith.constant dense<0.000000e+00> : vector<8x128xf32>
    %16 = tpu.matmul %15, %3, %cst_9 {dimension_numbers = #tpu.dot_dimension_numbers<[1], [0], [0], [1], [0, 0, 1, 1], [], []>} : vector<8x128xbf16>, vector<128x128xbf16>, vector<8x128xf32> -> vector<8x128xf32>
    %17 = arith.addf %14, %16 : vector<8x128xf32>
    %18 = math.tanh %17 : vector<8x128xf32>
    %c2_i32 = arith.constant 2 : i32
    %19 = arith.index_cast %c2_i32 : i32 to index
    %c0_10 = arith.constant 0 : index
    %c0_11 = arith.constant 0 : index
    %20 = vector.load %arg2[%19, %c0_10, %c0_11] : memref<8x8x128xf32, #tpu.memory_space<vmem>>, vector<1x8x128xf32>
    %21 = vector.shape_cast %20 : vector<1x8x128xf32> to vector<8x128xf32>
    %22 = arith.truncf %18 : vector<8x128xf32> to vector<8x128xbf16>
    %cst_12 = arith.constant dense<0.000000e+00> : vector<8x128xf32>
    %23 = tpu.matmul %22, %3, %cst_12 {dimension_numbers = #tpu.dot_dimension_numbers<[1], [0], [0], [1], [0, 0, 1, 1], [], []>} : vector<8x128xbf16>, vector<128x128xbf16>, vector<8x128xf32> -> vector<8x128xf32>
    %24 = arith.addf %21, %23 : vector<8x128xf32>
    %25 = math.tanh %24 : vector<8x128xf32>
    %c3_i32 = arith.constant 3 : i32
    %26 = arith.index_cast %c3_i32 : i32 to index
    %c0_13 = arith.constant 0 : index
    %c0_14 = arith.constant 0 : index
    %27 = vector.load %arg2[%26, %c0_13, %c0_14] : memref<8x8x128xf32, #tpu.memory_space<vmem>>, vector<1x8x128xf32>
    %28 = vector.shape_cast %27 : vector<1x8x128xf32> to vector<8x128xf32>
    %29 = arith.truncf %25 : vector<8x128xf32> to vector<8x128xbf16>
    %cst_15 = arith.constant dense<0.000000e+00> : vector<8x128xf32>
    %30 = tpu.matmul %29, %3, %cst_15 {dimension_numbers = #tpu.dot_dimension_numbers<[1], [0], [0], [1], [0, 0, 1, 1], [], []>} : vector<8x128xbf16>, vector<128x128xbf16>, vector<8x128xf32> -> vector<8x128xf32>
    %31 = arith.addf %28, %30 : vector<8x128xf32>
    %32 = math.tanh %31 : vector<8x128xf32>
    %c4_i32 = arith.constant 4 : i32
    %33 = arith.index_cast %c4_i32 : i32 to index
    %c0_16 = arith.constant 0 : index
    %c0_17 = arith.constant 0 : index
    %34 = vector.load %arg2[%33, %c0_16, %c0_17] : memref<8x8x128xf32, #tpu.memory_space<vmem>>, vector<1x8x128xf32>
    %35 = vector.shape_cast %34 : vector<1x8x128xf32> to vector<8x128xf32>
    %36 = arith.truncf %32 : vector<8x128xf32> to vector<8x128xbf16>
    %cst_18 = arith.constant dense<0.000000e+00> : vector<8x128xf32>
    %37 = tpu.matmul %36, %3, %cst_18 {dimension_numbers = #tpu.dot_dimension_numbers<[1], [0], [0], [1], [0, 0, 1, 1], [], []>} : vector<8x128xbf16>, vector<128x128xbf16>, vector<8x128xf32> -> vector<8x128xf32>
    %38 = arith.addf %35, %37 : vector<8x128xf32>
    %39 = math.tanh %38 : vector<8x128xf32>
    %c5_i32 = arith.constant 5 : i32
    %40 = arith.index_cast %c5_i32 : i32 to index
    %c0_19 = arith.constant 0 : index
    %c0_20 = arith.constant 0 : index
    %41 = vector.load %arg2[%40, %c0_19, %c0_20] : memref<8x8x128xf32, #tpu.memory_space<vmem>>, vector<1x8x128xf32>
    %42 = vector.shape_cast %41 : vector<1x8x128xf32> to vector<8x128xf32>
    %43 = arith.truncf %39 : vector<8x128xf32> to vector<8x128xbf16>
    %cst_21 = arith.constant dense<0.000000e+00> : vector<8x128xf32>
    %44 = tpu.matmul %43, %3, %cst_21 {dimension_numbers = #tpu.dot_dimension_numbers<[1], [0], [0], [1], [0, 0, 1, 1], [], []>} : vector<8x128xbf16>, vector<128x128xbf16>, vector<8x128xf32> -> vector<8x128xf32>
    %45 = arith.addf %42, %44 : vector<8x128xf32>
    %46 = math.tanh %45 : vector<8x128xf32>
    %c6_i32 = arith.constant 6 : i32
    %47 = arith.index_cast %c6_i32 : i32 to index
    %c0_22 = arith.constant 0 : index
    %c0_23 = arith.constant 0 : index
    %48 = vector.load %arg2[%47, %c0_22, %c0_23] : memref<8x8x128xf32, #tpu.memory_space<vmem>>, vector<1x8x128xf32>
    %49 = vector.shape_cast %48 : vector<1x8x128xf32> to vector<8x128xf32>
    %50 = arith.truncf %46 : vector<8x128xf32> to vector<8x128xbf16>
    %cst_24 = arith.constant dense<0.000000e+00> : vector<8x128xf32>
    %51 = tpu.matmul %50, %3, %cst_24 {dimension_numbers = #tpu.dot_dimension_numbers<[1], [0], [0], [1], [0, 0, 1, 1], [], []>} : vector<8x128xbf16>, vector<128x128xbf16>, vector<8x128xf32> -> vector<8x128xf32>
    %52 = arith.addf %49, %51 : vector<8x128xf32>
    %53 = math.tanh %52 : vector<8x128xf32>
    %c7_i32 = arith.constant 7 : i32
    %54 = arith.index_cast %c7_i32 : i32 to index
    %c0_25 = arith.constant 0 : index
    %c0_26 = arith.constant 0 : index
    %55 = vector.load %arg2[%54, %c0_25, %c0_26] : memref<8x8x128xf32, #tpu.memory_space<vmem>>, vector<1x8x128xf32>
    %56 = vector.shape_cast %55 : vector<1x8x128xf32> to vector<8x128xf32>
    %57 = arith.truncf %53 : vector<8x128xf32> to vector<8x128xbf16>
    %cst_27 = arith.constant dense<0.000000e+00> : vector<8x128xf32>
    %58 = tpu.matmul %57, %3, %cst_27 {dimension_numbers = #tpu.dot_dimension_numbers<[1], [0], [0], [1], [0, 0, 1, 1], [], []>} : vector<8x128xbf16>, vector<128x128xbf16>, vector<8x128xf32> -> vector<8x128xf32>
    %59 = arith.addf %56, %58 : vector<8x128xf32>
    %60 = math.tanh %59 : vector<8x128xf32>
    %c8_i32 = arith.constant 8 : i32
    %c0_28 = arith.constant 0 : index
    %c0_29 = arith.constant 0 : index
    %61 = vector.load %arg8[%c0_28, %c0_29] : memref<8x128xf32, #tpu.memory_space<vmem>>, vector<8x128xf32>
    tpu.vector_store %arg8[%c0_28, %c0_29], %60 {strides = array<i32>} : memref<8x128xf32, #tpu.memory_space<vmem>>, vector<8x128xf32>,
    %c0_i32_30 = arith.constant 0 : i32
    %62 = arith.cmpi eq, %arg1, %c0_i32_30 : i32
    %63 = arith.extui %62 : i1 to i32
    %c0_i32_31 = arith.constant 0 : i32
    %64 = arith.cmpi ne, %63, %c0_i32_31 : i32
    scf.if %64 {
      %65 = arith.truncf %60 : vector<8x128xf32> to vector<8x128xbf16>
      %c0_32 = arith.constant 0 : index
      %c0_33 = arith.constant 0 : index
      %66 = vector.load %arg5[%c0_32, %c0_33] : memref<128x128xbf16, #tpu.memory_space<vmem>>, vector<128x128xbf16>
      %cst_34 = arith.constant dense<0.000000e+00> : vector<8x128xf32>
      %67 = tpu.matmul %65, %66, %cst_34 {dimension_numbers = #tpu.dot_dimension_numbers<[1], [0], [0], [1], [0, 0, 1, 1], [], []>} : vector<8x128xbf16>, vector<128x128xbf16>, vector<8x128xf32> -> vector<8x128xf32>
      %c0_35 = arith.constant 0 : index
      %c0_36 = arith.constant 0 : index
      %68 = vector.load %arg6[%c0_35, %c0_36] : memref<1x128xf32, #tpu.memory_space<vmem>>, vector<1x128xf32>
      %69 = vector.broadcast %68 : vector<1x128xf32> to vector<8x128xf32>
      %70 = arith.addf %67, %69 : vector<8x128xf32>
      %c0_37 = arith.constant 0 : index
      %c0_38 = arith.constant 0 : index
      %71 = vector.load %arg7[%c0_37, %c0_38] : memref<8x128xf32, #tpu.memory_space<vmem>>, vector<8x128xf32>
      tpu.vector_store %arg7[%c0_37, %c0_38], %70 {strides = array<i32>} : memref<8x128xf32, #tpu.memory_space<vmem>>, vector<8x128xf32>,
    } else {
    }
    return
  }
  func.func @transform_0(%arg0: i32, %arg1: i32) -> (i32, i32, i32) {
    %c0_i32 = arith.constant 0 : i32
    %c0_i32_0 = arith.constant 0 : i32
    return %arg1, %arg0, %c0_i32 : i32, i32, i32
  }
  func.func @transform_1(%arg0: i32, %arg1: i32) -> (i32, i32) {
    %c0_i32 = arith.constant 0 : i32
    %c0_i32_0 = arith.constant 0 : i32
    return %arg0, %c0_i32 : i32, i32
  }
  func.func @transform_2(%arg0: i32, %arg1: i32) -> (i32, i32) {
    %c0_i32 = arith.constant 0 : i32
    %c0_i32_0 = arith.constant 0 : i32
    %c0_i32_1 = arith.constant 0 : i32
    return %c0_i32, %c0_i32_0 : i32, i32
  }
  func.func @transform_3(%arg0: i32, %arg1: i32) -> (i32, i32) {
    %c0_i32 = arith.constant 0 : i32
    %c0_i32_0 = arith.constant 0 : i32
    %c0_i32_1 = arith.constant 0 : i32
    return %c0_i32, %c0_i32_0 : i32, i32
  }
  func.func @transform_4(%arg0: i32, %arg1: i32) -> (i32, i32) {
    %c0_i32 = arith.constant 0 : i32
    %c0_i32_0 = arith.constant 0 : i32
    %c0_i32_1 = arith.constant 0 : i32
    return %c0_i32, %c0_i32_0 : i32, i32
  }
  func.func @transform_5(%arg0: i32, %arg1: i32) -> (i32, i32) {
    %c0_i32 = arith.constant 0 : i32
    %c0_i32_0 = arith.constant 0 : i32
    return %arg0, %c0_i32 : i32, i32
  }
}

</mosaic_0001>

<llo_original>
// kernel: tpu_custom_call.1
$region0: #{tpu_custom_call.1}
  #allocation0 [shape = 'u32[]', space=smem, size = 0x4, offset = 0x4, fixed_abs, tag = 'smem constant byte address 0x4 - core index']
  #allocation1 [shape = 'u32[144,128]{1,0:T(1,128)}', space=vmem, size = 0x12000, scoped, tag = 'internal scratch']
  #allocation2 [shape = 'f32[8,128]{1,0:T(8,128)}', space=vmem, size = 0x1000, scoped, tag = 'scratch operand']
  %s0 = inlined_call_operand.hbm [shape: f32[8,8,128], index: 0, kind: input, shape index: {}]
  %s1 = inlined_call_operand.hbm [shape: f32[8,128], index: 1, kind: input, shape index: {}]
  %s2 = inlined_call_operand.hbm [shape: bf16[128,128], index: 2, kind: input, shape index: {}]
  %s3 = inlined_call_operand.hbm [shape: bf16[128,128], index: 3, kind: input, shape index: {}]
  %s4 = inlined_call_operand.vmem [shape: f32[1,128], index: 4, kind: input, shape index: {}]
  %s5 = inlined_call_operand.hbm [shape: f32[8,128], index: 5, kind: output, shape index: {}]
  %s6 = sld [smem:[#allocation0]]
  $region54: #{tpu_custom_call.1} parent=0
    _
  %s8 = ssub.s32 1, %s6
  %s9 = scalar_select 0, %s8, %s6
  $region1: #{tpu_custom_call.1} parent=0
    #allocation3 [shape = 'u8[32768]{0}', space=vmem, size = 0x8000, scoped, tag = 'input window, operand 0, single buffered']
    #allocation4 [shape = 's32[1]{0}', space=sflag, size = 0x4, scoped, tag = 'scoped memory for tpu_custom_call.1']
    #allocation5 [shape = 's32[1]{0}', space=sflag, size = 0x4, scoped, tag = 'scoped memory for tpu_custom_call.1']
    #allocation6 [shape = 'u8[4096]{0}', space=vmem, size = 0x1000, scoped, tag = 'input window, operand 1, single buffered']
    #allocation7 [shape = 's32[1]{0}', space=sflag, size = 0x4, scoped, tag = 'scoped memory for tpu_custom_call.1']
    #allocation8 [shape = 'u8[32768]{0}', space=vmem, size = 0x8000, scoped, tag = 'input window, operand 2, single buffered']
    #allocation9 [shape = 'u8[32768]{0}', space=vmem, size = 0x8000, scoped, tag = 'input window, operand 3, single buffered']
    #allocation10 [shape = 's32[1]{0}', space=sflag, size = 0x4, scoped, tag = 'scoped memory for tpu_custom_call.1']
    #allocation11 [shape = 'u8[4096]{0}', space=vmem, size = 0x1000, scoped, tag = 'output window, operand 0, single buffered']
    %10 = vsyncpa [#allocation4], 0
    %11 = vsyncpa [#allocation7], 0
    %12 = vsyncpa [#allocation10], 0
    %13 = vsyncpa [#allocation5], 0
    // Predicated region
    $region2: #{tpu_custom_call.1} parent=1 // pred_check
      _
    $region3: #{tpu_custom_call.1} parent=1 // pred_check_branch
      %15 = sbr.rel (0) target = $region5
    $region4: #{tpu_custom_call.1} parent=1 // pred_region
      %s17 = ssub.s32 1024, 1024
      %18 = vsyncadd [#allocation4], %s17
      %s19 = sshll.u32 [#allocation3], 4
      %s20 = int_to_ptr.vmem [resolvable:$true] %s19
      %25 = dma.hbm_to_vmem [thread:$0]  %s0, 1024, %s20, [#allocation4], 128, 128, 8
    $region5: #{tpu_custom_call.1} parent=1 // pred_fallthru
      _
    // Predicated region
    $region6: #{tpu_custom_call.1} parent=1 // pred_check
      _
    $region7: #{tpu_custom_call.1} parent=1 // pred_check_branch
      %27 = sbr.rel (0) target = $region9
    $region8: #{tpu_custom_call.1} parent=1 // pred_region
      %s29 = ssub.s32 128, 128
      %30 = vsyncadd [#allocation7], %s29
      %s32 = sshll.u32 [#allocation6], 4
      %s33 = int_to_ptr.vmem [resolvable:$true] %s32
      %35 = dma.hbm_to_vmem [thread:$0]  %s1, 128, %s33, [#allocation7]
    $region9: #{tpu_custom_call.1} parent=1 // pred_fallthru
      _
    // Predicated region
    $region10: #{tpu_custom_call.1} parent=1 // pred_check
      _
    $region11: #{tpu_custom_call.1} parent=1 // pred_check_branch
      %37 = sbr.rel (0) target = $region13
    $region12: #{tpu_custom_call.1} parent=1 // pred_region
      %s39 = ssub.s32 1024, 1024
      %40 = vsyncadd [#allocation7], %s39
      %s41 = sshll.u32 [#allocation8], 4
      %s42 = int_to_ptr.vmem [resolvable:$true] %s41
      %47 = dma.hbm_to_vmem [thread:$0]  %s2, 1024, %s42, [#allocation7], 64, 64, 4
    $region13: #{tpu_custom_call.1} parent=1 // pred_fallthru
      _
    // Predicated region
    $region14: #{tpu_custom_call.1} parent=1 // pred_check
      _
    $region15: #{tpu_custom_call.1} parent=1 // pred_check_branch
      %49 = sbr.rel (0) target = $region17
    $region16: #{tpu_custom_call.1} parent=1 // pred_region
      %s51 = ssub.s32 1024, 1024
      %52 = vsyncadd [#allocation10], %s51
      %s53 = sshll.u32 [#allocation9], 4
      %s54 = int_to_ptr.vmem [resolvable:$true] %s53
      %59 = dma.hbm_to_vmem [thread:$0]  %s3, 1024, %s54, [#allocation10], 64, 64, 4
    $region17: #{tpu_custom_call.1} parent=1 // pred_fallthru
      _
    // Predicated region
    $region18: #{tpu_custom_call.1} parent=1 // pred_check
      _
    $region19: #{tpu_custom_call.1} parent=1 // pred_check_branch
      %61 = sbr.rel (0) target = $region21
    $region20: #{tpu_custom_call.1} parent=1 // pred_region
      _
    $region21: #{tpu_custom_call.1} parent=1 // pred_fallthru
      _
    // Predicated region
    $region22: #{tpu_custom_call.1} parent=1 // pred_check
      _
    $region23: #{tpu_custom_call.1} parent=1 // pred_check_branch
      %63 = sbr.rel (0) target = $region25
    $region24: #{tpu_custom_call.1} parent=1 // pred_region
      %64 = dma.done [#allocation4], 1024
    $region25: #{tpu_custom_call.1} parent=1 // pred_fallthru
      _
    // Predicated region
    $region26: #{tpu_custom_call.1} parent=1 // pred_check
      _
    $region27: #{tpu_custom_call.1} parent=1 // pred_check_branch
      %66 = sbr.rel (0) target = $region29
    $region28: #{tpu_custom_call.1} parent=1 // pred_region
      %67 = dma.done [#allocation7], 128
    $region29: #{tpu_custom_call.1} parent=1 // pred_fallthru
      _
    // Predicated region
    $region30: #{tpu_custom_call.1} parent=1 // pred_check
      _
    $region31: #{tpu_custom_call.1} parent=1 // pred_check_branch
      %69 = sbr.rel (0) target = $region33
    $region32: #{tpu_custom_call.1} parent=1 // pred_region
      %70 = dma.done [#allocation7], 1024
    $region33: #{tpu_custom_call.1} parent=1 // pred_fallthru
      _
    // Predicated region
    $region34: #{tpu_custom_call.1} parent=1 // pred_check
      _
    $region35: #{tpu_custom_call.1} parent=1 // pred_check_branch
      %72 = sbr.rel (0) target = $region37
    $region36: #{tpu_custom_call.1} parent=1 // pred_region
      %73 = dma.done [#allocation10], 1024
    $region37: #{tpu_custom_call.1} parent=1 // pred_fallthru
      _
    %p75 = scmp.eq.s32.totalorder 0, 0
    // Predicated region
    $region38: #{tpu_custom_call.1} parent=1 // pred_check
      %p76 = pneg %p75
    $region39: #{tpu_custom_call.1} parent=1 // pred_check_branch
      %78 = sbr.rel (%p76) target = $region41
    $region40: #{tpu_custom_call.1} parent=1 // pred_region
      %v79 = vld [vmem:[#allocation6] sm:$0xff]
      %80 = vst [vmem:[#allocation2] sm:$0xff] %v79
    $region41: #{tpu_custom_call.1} parent=1 // pred_fallthru
      _
    %v81 = vld [vmem:[#allocation8] sm:$0xf]
    %v82 = vld [vmem:[#allocation8 + $0x4] sm:$0xf]
    %v83 = vld [vmem:[#allocation8 + $0x8] sm:$0xf]
    %v84 = vld [vmem:[#allocation8 + $0xc] sm:$0xf]
    %v85 = vld [vmem:[#allocation8 + $0x10] sm:$0xf]
    %v86 = vld [vmem:[#allocation8 + $0x14] sm:$0xf]
    %v87 = vld [vmem:[#allocation8 + $0x18] sm:$0xf]
    %v88 = vld [vmem:[#allocation8 + $0x1c] sm:$0xf]
    %v89 = vld [vmem:[#allocation8 + $0x20] sm:$0xf]
    %v90 = vld [vmem:[#allocation8 + $0x24] sm:$0xf]
    %v91 = vld [vmem:[#allocation8 + $0x28] sm:$0xf]
    %v92 = vld [vmem:[#allocation8 + $0x2c] sm:$0xf]
    %v93 = vld [vmem:[#allocation8 + $0x30] sm:$0xf]
    %v94 = vld [vmem:[#allocation8 + $0x34] sm:$0xf]
    %v95 = vld [vmem:[#allocation8 + $0x38] sm:$0xf]
    %v96 = vld [vmem:[#allocation8 + $0x3c] sm:$0xf]
    %v97 = vld [vmem:[#allocation2] sm:$0xff]
    %v98 = vld [vmem:[#allocation3] sm:$0xff]
    %v99 = vpack.c.bf16 %v97, %v97
    %v116 = vunpack.c.l.b16 %v81
    %v117 = vunpack.c.l.b16 %v82
    %v118 = vunpack.c.l.b16 %v83
    %v119 = vunpack.c.l.b16 %v84
    %v120 = vunpack.c.l.b16 %v85
    %v121 = vunpack.c.l.b16 %v86
    %v122 = vunpack.c.l.b16 %v87
    %v123 = vunpack.c.l.b16 %v88
    %v124 = vunpack.c.l.b16 %v89
    %v125 = vunpack.c.l.b16 %v90
    %v126 = vunpack.c.l.b16 %v91
    %v127 = vunpack.c.l.b16 %v92
    %v128 = vunpack.c.l.b16 %v93
    %v129 = vunpack.c.l.b16 %v94
    %v130 = vunpack.c.l.b16 %v95
    %v131 = vunpack.c.l.b16 %v96
    %v132 = vpack.c.b16 %v117, %v116
    %v133 = vpack.c.b16 %v119, %v118
    %v134 = vpack.c.b16 %v121, %v120
    %v135 = vpack.c.b16 %v123, %v122
    %v136 = vpack.c.b16 %v125, %v124
    %v137 = vpack.c.b16 %v127, %v126
    %v138 = vpack.c.b16 %v129, %v128
    %v139 = vpack.c.b16 %v131, %v130
    %148 = vmatprep.subr.bf16.mxu0 0
    %149 = vmatpush1.bf16.msra.mxu0 %v132
    %150 = vmatprep.subr.bf16.mxu0 0
    %151 = vmatpush1.bf16.msra.mxu0 %v133
    %152 = vmatprep.subr.bf16.mxu0 0
    %153 = vmatpush1.bf16.msra.mxu0 %v134
    %154 = vmatprep.subr.bf16.mxu0 0
    %155 = vmatpush1.bf16.msra.mxu0 %v135
    %156 = vmatprep.subr.bf16.mxu0 0
    %157 = vmatpush1.bf16.msra.mxu0 %v136
    %158 = vmatprep.subr.bf16.mxu0 0
    %159 = vmatpush1.bf16.msra.mxu0 %v137
    %160 = vmatprep.subr.bf16.mxu0 0
    %161 = vmatpush1.bf16.msra.mxu0 %v138
    %162 = vmatprep.subr.bf16.mxu0 0
    %163 = vmatpush1.bf16.msra.mxu0 %v139
    %164 = vmatprep.subr.bf16.mxu0 0
    %165 = vmatpush1.bf16.msra.mxu0 0
    %166 = vmatprep.subr.bf16.mxu0 0
    %167 = vmatpush1.bf16.msra.mxu0 0
    %168 = vmatprep.subr.bf16.mxu0 0
    %169 = vmatpush1.bf16.msra.mxu0 0
    %170 = vmatprep.subr.bf16.mxu0 0
    %171 = vmatpush1.bf16.msra.mxu0 0
    %172 = vmatprep.subr.bf16.mxu0 0
    %173 = vmatpush1.bf16.msra.mxu0 0
    %174 = vmatprep.subr.bf16.mxu0 0
    %175 = vmatpush1.bf16.msra.mxu0 0
    %176 = vmatprep.subr.bf16.mxu0 0
    %177 = vmatpush1.bf16.msra.mxu0 0
    %178 = vmatprep.subr.bf16.mxu0 0
    %179 = vmatpush1.bf16.msra.mxu0 0
    %180 = vmatprep.mubr.bf16.mxu0 0
    %181 = vmatmul.mubr.bf16.gmra.mrb[0].mxu0 %v99
    %v182 = vpop.f32.mrb[0].mxu0
    %v183 = vadd.f32 0.0, %v182
    %v184 = vpop.f32.mrb[0].mxu0
    %v185 = vpop.f32.mrb[0].mxu0
    %v186 = vpop.f32.mrb[0].mxu0
    %187 = vdwg.mxu0
    %v188 = vadd.f32 %v98, %v183
    %v189 = vtanh.pop %v188
    %s190 = scalar_lea.vmem [#allocation3], 8
    %v191 = vld [vmem:[%s190] sm:$0xff]
    %v192 = vpack.c.bf16 %v189, %v189
    %193 = vmatprep.subr.bf16.mxu0 0
    %194 = vmatpush1.bf16.msra.mxu0 %v132
    %195 = vmatprep.subr.bf16.mxu0 0
    %196 = vmatpush1.bf16.msra.mxu0 %v133
    %197 = vmatprep.subr.bf16.mxu0 0
    %198 = vmatpush1.bf16.msra.mxu0 %v134
    %199 = vmatprep.subr.bf16.mxu0 0
    %200 = vmatpush1.bf16.msra.mxu0 %v135
    %201 = vmatprep.subr.bf16.mxu0 0
    %202 = vmatpush1.bf16.msra.mxu0 %v136
    %203 = vmatprep.subr.bf16.mxu0 0
    %204 = vmatpush1.bf16.msra.mxu0 %v137
    %205 = vmatprep.subr.bf16.mxu0 0
    %206 = vmatpush1.bf16.msra.mxu0 %v138
    %207 = vmatprep.subr.bf16.mxu0 0
    %208 = vmatpush1.bf16.msra.mxu0 %v139
    %209 = vmatprep.subr.bf16.mxu0 0
    %210 = vmatpush1.bf16.msra.mxu0 0
    %211 = vmatprep.subr.bf16.mxu0 0
    %212 = vmatpush1.bf16.msra.mxu0 0
    %213 = vmatprep.subr.bf16.mxu0 0
    %214 = vmatpush1.bf16.msra.mxu0 0
    %215 = vmatprep.subr.bf16.mxu0 0
    %216 = vmatpush1.bf16.msra.mxu0 0
    %217 = vmatprep.subr.bf16.mxu0 0
    %218 = vmatpush1.bf16.msra.mxu0 0
    %219 = vmatprep.subr.bf16.mxu0 0
    %220 = vmatpush1.bf16.msra.mxu0 0
    %221 = vmatprep.subr.bf16.mxu0 0
    %222 = vmatpush1.bf16.msra.mxu0 0
    %223 = vmatprep.subr.bf16.mxu0 0
    %224 = vmatpush1.bf16.msra.mxu0 0
    %225 = vmatprep.mubr.bf16.mxu0 0
    %226 = vmatmul.mubr.bf16.gmra.mrb[0].mxu0 %v192
    %v227 = vpop.f32.mrb[0].mxu0
    %v228 = vadd.f32 0.0, %v227
    %v229 = vpop.f32.mrb[0].mxu0
    %v230 = vpop.f32.mrb[0].mxu0
    %v231 = vpop.f32.mrb[0].mxu0
    %232 = vdwg.mxu0
    %v233 = vadd.f32 %v191, %v228
    %v234 = vtanh.pop %v233
    %s235 = scalar_lea.vmem [#allocation3], 16
    %v236 = vld [vmem:[%s235] sm:$0xff]
    %v237 = vpack.c.bf16 %v234, %v234
    %238 = vmatprep.subr.bf16.mxu0 0
    %239 = vmatpush1.bf16.msra.mxu0 %v132
    %240 = vmatprep.subr.bf16.mxu0 0
    %241 = vmatpush1.bf16.msra.mxu0 %v133
    %242 = vmatprep.subr.bf16.mxu0 0
    %243 = vmatpush1.bf16.msra.mxu0 %v134
    %244 = vmatprep.subr.bf16.mxu0 0
    %245 = vmatpush1.bf16.msra.mxu0 %v135
    %246 = vmatprep.subr.bf16.mxu0 0
    %247 = vmatpush1.bf16.msra.mxu0 %v136
    %248 = vmatprep.subr.bf16.mxu0 0
    %249 = vmatpush1.bf16.msra.mxu0 %v137
    %250 = vmatprep.subr.bf16.mxu0 0
    %251 = vmatpush1.bf16.msra.mxu0 %v138
    %252 = vmatprep.subr.bf16.mxu0 0
    %253 = vmatpush1.bf16.msra.mxu0 %v139
    %254 = vmatprep.subr.bf16.mxu0 0
    %255 = vmatpush1.bf16.msra.mxu0 0
    %256 = vmatprep.subr.bf16.mxu0 0
    %257 = vmatpush1.bf16.msra.mxu0 0
    %258 = vmatprep.subr.bf16.mxu0 0
    %259 = vmatpush1.bf16.msra.mxu0 0
    %260 = vmatprep.subr.bf16.mxu0 0
    %261 = vmatpush1.bf16.msra.mxu0 0
    %262 = vmatprep.subr.bf16.mxu0 0
    %263 = vmatpush1.bf16.msra.mxu0 0
    %264 = vmatprep.subr.bf16.mxu0 0
    %265 = vmatpush1.bf16.msra.mxu0 0
    %266 = vmatprep.subr.bf16.mxu0 0
    %267 = vmatpush1.bf16.msra.mxu0 0
    %268 = vmatprep.subr.bf16.mxu0 0
    %269 = vmatpush1.bf16.msra.mxu0 0
    %270 = vmatprep.mubr.bf16.mxu0 0
    %271 = vmatmul.mubr.bf16.gmra.mrb[0].mxu0 %v237
    %v272 = vpop.f32.mrb[0].mxu0
    %v273 = vadd.f32 0.0, %v272
    %v274 = vpop.f32.mrb[0].mxu0
    %v275 = vpop.f32.mrb[0].mxu0
    %v276 = vpop.f32.mrb[0].mxu0
    %277 = vdwg.mxu0
    %v278 = vadd.f32 %v236, %v273
    %v279 = vtanh.pop %v278
    %s280 = scalar_lea.vmem [#allocation3], 24
    %v281 = vld [vmem:[%s280] sm:$0xff]
    %v282 = vpack.c.bf16 %v279, %v279
    %283 = vmatprep.subr.bf16.mxu0 0
    %284 = vmatpush1.bf16.msra.mxu0 %v132
    %285 = vmatprep.subr.bf16.mxu0 0
    %286 = vmatpush1.bf16.msra.mxu0 %v133
    %287 = vmatprep.subr.bf16.mxu0 0
    %288 = vmatpush1.bf16.msra.mxu0 %v134
    %289 = vmatprep.subr.bf16.mxu0 0
    %290 = vmatpush1.bf16.msra.mxu0 %v135
    %291 = vmatprep.subr.bf16.mxu0 0
    %292 = vmatpush1.bf16.msra.mxu0 %v136
    %293 = vmatprep.subr.bf16.mxu0 0
    %294 = vmatpush1.bf16.msra.mxu0 %v137
    %295 = vmatprep.subr.bf16.mxu0 0
    %296 = vmatpush1.bf16.msra.mxu0 %v138
    %297 = vmatprep.subr.bf16.mxu0 0
    %298 = vmatpush1.bf16.msra.mxu0 %v139
    %299 = vmatprep.subr.bf16.mxu0 0
    %300 = vmatpush1.bf16.msra.mxu0 0
    %301 = vmatprep.subr.bf16.mxu0 0
    %302 = vmatpush1.bf16.msra.mxu0 0
    %303 = vmatprep.subr.bf16.mxu0 0
    %304 = vmatpush1.bf16.msra.mxu0 0
    %305 = vmatprep.subr.bf16.mxu0 0
    %306 = vmatpush1.bf16.msra.mxu0 0
    %307 = vmatprep.subr.bf16.mxu0 0
    %308 = vmatpush1.bf16.msra.mxu0 0
    %309 = vmatprep.subr.bf16.mxu0 0
    %310 = vmatpush1.bf16.msra.mxu0 0
    %311 = vmatprep.subr.bf16.mxu0 0
    %312 = vmatpush1.bf16.msra.mxu0 0
    %313 = vmatprep.subr.bf16.mxu0 0
    %314 = vmatpush1.bf16.msra.mxu0 0
    %315 = vmatprep.mubr.bf16.mxu0 0
    %316 = vmatmul.mubr.bf16.gmra.mrb[0].mxu0 %v282
    %v317 = vpop.f32.mrb[0].mxu0
    %v318 = vadd.f32 0.0, %v317
    %v319 = vpop.f32.mrb[0].mxu0
    %v320 = vpop.f32.mrb[0].mxu0
    %v321 = vpop.f32.mrb[0].mxu0
    %322 = vdwg.mxu0
    %v323 = vadd.f32 %v281, %v318
    %v324 = vtanh.pop %v323
    %s325 = scalar_lea.vmem [#allocation3], 32
    %v326 = vld [vmem:[%s325] sm:$0xff]
    %v327 = vpack.c.bf16 %v324, %v324
    %328 = vmatprep.subr.bf16.mxu0 0
    %329 = vmatpush1.bf16.msra.mxu0 %v132
    %330 = vmatprep.subr.bf16.mxu0 0
    %331 = vmatpush1.bf16.msra.mxu0 %v133
    %332 = vmatprep.subr.bf16.mxu0 0
    %333 = vmatpush1.bf16.msra.mxu0 %v134
    %334 = vmatprep.subr.bf16.mxu0 0
    %335 = vmatpush1.bf16.msra.mxu0 %v135
    %336 = vmatprep.subr.bf16.mxu0 0
    %337 = vmatpush1.bf16.msra.mxu0 %v136
    %338 = vmatprep.subr.bf16.mxu0 0
    %339 = vmatpush1.bf16.msra.mxu0 %v137
    %340 = vmatprep.subr.bf16.mxu0 0
    %341 = vmatpush1.bf16.msra.mxu0 %v138
    %342 = vmatprep.subr.bf16.mxu0 0
    %343 = vmatpush1.bf16.msra.mxu0 %v139
    %344 = vmatprep.subr.bf16.mxu0 0
    %345 = vmatpush1.bf16.msra.mxu0 0
    %346 = vmatprep.subr.bf16.mxu0 0
    %347 = vmatpush1.bf16.msra.mxu0 0
    %348 = vmatprep.subr.bf16.mxu0 0
    %349 = vmatpush1.bf16.msra.mxu0 0
    %350 = vmatprep.subr.bf16.mxu0 0
    %351 = vmatpush1.bf16.msra.mxu0 0
    %352 = vmatprep.subr.bf16.mxu0 0
    %353 = vmatpush1.bf16.msra.mxu0 0
    %354 = vmatprep.subr.bf16.mxu0 0
    %355 = vmatpush1.bf16.msra.mxu0 0
    %356 = vmatprep.subr.bf16.mxu0 0
    %357 = vmatpush1.bf16.msra.mxu0 0
    %358 = vmatprep.subr.bf16.mxu0 0
    %359 = vmatpush1.bf16.msra.mxu0 0
    %360 = vmatprep.mubr.bf16.mxu0 0
    %361 = vmatmul.mubr.bf16.gmra.mrb[0].mxu0 %v327
    %v362 = vpop.f32.mrb[0].mxu0
    %v363 = vadd.f32 0.0, %v362
    %v364 = vpop.f32.mrb[0].mxu0
    %v365 = vpop.f32.mrb[0].mxu0
    %v366 = vpop.f32.mrb[0].mxu0
    %367 = vdwg.mxu0
    %v368 = vadd.f32 %v326, %v363
    %v369 = vtanh.pop %v368
    %s370 = scalar_lea.vmem [#allocation3], 40
    %v371 = vld [vmem:[%s370] sm:$0xff]
    %v372 = vpack.c.bf16 %v369, %v369
    %373 = vmatprep.subr.bf16.mxu0 0
    %374 = vmatpush1.bf16.msra.mxu0 %v132
    %375 = vmatprep.subr.bf16.mxu0 0
    %376 = vmatpush1.bf16.msra.mxu0 %v133
    %377 = vmatprep.subr.bf16.mxu0 0
    %378 = vmatpush1.bf16.msra.mxu0 %v134
    %379 = vmatprep.subr.bf16.mxu0 0
    %380 = vmatpush1.bf16.msra.mxu0 %v135
    %381 = vmatprep.subr.bf16.mxu0 0
    %382 = vmatpush1.bf16.msra.mxu0 %v136
    %383 = vmatprep.subr.bf16.mxu0 0
    %384 = vmatpush1.bf16.msra.mxu0 %v137
    %385 = vmatprep.subr.bf16.mxu0 0
    %386 = vmatpush1.bf16.msra.mxu0 %v138
    %387 = vmatprep.subr.bf16.mxu0 0
    %388 = vmatpush1.bf16.msra.mxu0 %v139
    %389 = vmatprep.subr.bf16.mxu0 0
    %390 = vmatpush1.bf16.msra.mxu0 0
    %391 = vmatprep.subr.bf16.mxu0 0
    %392 = vmatpush1.bf16.msra.mxu0 0
    %393 = vmatprep.subr.bf16.mxu0 0
    %394 = vmatpush1.bf16.msra.mxu0 0
    %395 = vmatprep.subr.bf16.mxu0 0
    %396 = vmatpush1.bf16.msra.mxu0 0
    %397 = vmatprep.subr.bf16.mxu0 0
    %398 = vmatpush1.bf16.msra.mxu0 0
    %399 = vmatprep.subr.bf16.mxu0 0
    %400 = vmatpush1.bf16.msra.mxu0 0
    %401 = vmatprep.subr.bf16.mxu0 0
    %402 = vmatpush1.bf16.msra.mxu0 0
    %403 = vmatprep.subr.bf16.mxu0 0
    %404 = vmatpush1.bf16.msra.mxu0 0
    %405 = vmatprep.mubr.bf16.mxu0 0
    %406 = vmatmul.mubr.bf16.gmra.mrb[0].mxu0 %v372
    %v407 = vpop.f32.mrb[0].mxu0
    %v408 = vadd.f32 0.0, %v407
    %v409 = vpop.f32.mrb[0].mxu0
    %v410 = vpop.f32.mrb[0].mxu0
    %v411 = vpop.f32.mrb[0].mxu0
    %412 = vdwg.mxu0
    %v413 = vadd.f32 %v371, %v408
    %v414 = vtanh.pop %v413
    %s415 = scalar_lea.vmem [#allocation3], 48
    %v416 = vld [vmem:[%s415] sm:$0xff]
    %v417 = vpack.c.bf16 %v414, %v414
    %418 = vmatprep.subr.bf16.mxu0 0
    %419 = vmatpush1.bf16.msra.mxu0 %v132
    %420 = vmatprep.subr.bf16.mxu0 0
    %421 = vmatpush1.bf16.msra.mxu0 %v133
    %422 = vmatprep.subr.bf16.mxu0 0
    %423 = vmatpush1.bf16.msra.mxu0 %v134
    %424 = vmatprep.subr.bf16.mxu0 0
    %425 = vmatpush1.bf16.msra.mxu0 %v135
    %426 = vmatprep.subr.bf16.mxu0 0
    %427 = vmatpush1.bf16.msra.mxu0 %v136
    %428 = vmatprep.subr.bf16.mxu0 0
    %429 = vmatpush1.bf16.msra.mxu0 %v137
    %430 = vmatprep.subr.bf16.mxu0 0
    %431 = vmatpush1.bf16.msra.mxu0 %v138
    %432 = vmatprep.subr.bf16.mxu0 0
    %433 = vmatpush1.bf16.msra.mxu0 %v139
    %434 = vmatprep.subr.bf16.mxu0 0
    %435 = vmatpush1.bf16.msra.mxu0 0
    %436 = vmatprep.subr.bf16.mxu0 0
    %437 = vmatpush1.bf16.msra.mxu0 0
    %438 = vmatprep.subr.bf16.mxu0 0
    %439 = vmatpush1.bf16.msra.mxu0 0
    %440 = vmatprep.subr.bf16.mxu0 0
    %441 = vmatpush1.bf16.msra.mxu0 0
    %442 = vmatprep.subr.bf16.mxu0 0
    %443 = vmatpush1.bf16.msra.mxu0 0
    %444 = vmatprep.subr.bf16.mxu0 0
    %445 = vmatpush1.bf16.msra.mxu0 0
    %446 = vmatprep.subr.bf16.mxu0 0
    %447 = vmatpush1.bf16.msra.mxu0 0
    %448 = vmatprep.subr.bf16.mxu0 0
    %449 = vmatpush1.bf16.msra.mxu0 0
    %450 = vmatprep.mubr.bf16.mxu0 0
    %451 = vmatmul.mubr.bf16.gmra.mrb[0].mxu0 %v417
    %v452 = vpop.f32.mrb[0].mxu0
    %v453 = vadd.f32 0.0, %v452
    %v454 = vpop.f32.mrb[0].mxu0
    %v455 = vpop.f32.mrb[0].mxu0
    %v456 = vpop.f32.mrb[0].mxu0
    %457 = vdwg.mxu0
    %v458 = vadd.f32 %v416, %v453
    %v459 = vtanh.pop %v458
    %s460 = scalar_lea.vmem [#allocation3], 56
    %v461 = vld [vmem:[%s460] sm:$0xff]
    %v462 = vpack.c.bf16 %v459, %v459
    %463 = vmatprep.subr.bf16.mxu0 0
    %464 = vmatpush1.bf16.msra.mxu0 %v132
    %465 = vmatprep.subr.bf16.mxu0 0
    %466 = vmatpush1.bf16.msra.mxu0 %v133
    %467 = vmatprep.subr.bf16.mxu0 0
    %468 = vmatpush1.bf16.msra.mxu0 %v134
    %469 = vmatprep.subr.bf16.mxu0 0
    %470 = vmatpush1.bf16.msra.mxu0 %v135
    %471 = vmatprep.subr.bf16.mxu0 0
    %472 = vmatpush1.bf16.msra.mxu0 %v136
    %473 = vmatprep.subr.bf16.mxu0 0
    %474 = vmatpush1.bf16.msra.mxu0 %v137
    %475 = vmatprep.subr.bf16.mxu0 0
    %476 = vmatpush1.bf16.msra.mxu0 %v138
    %477 = vmatprep.subr.bf16.mxu0 0
    %478 = vmatpush1.bf16.msra.mxu0 %v139
    %479 = vmatprep.subr.bf16.mxu0 0
    %480 = vmatpush1.bf16.msra.mxu0 0
    %481 = vmatprep.subr.bf16.mxu0 0
    %482 = vmatpush1.bf16.msra.mxu0 0
    %483 = vmatprep.subr.bf16.mxu0 0
    %484 = vmatpush1.bf16.msra.mxu0 0
    %485 = vmatprep.subr.bf16.mxu0 0
    %486 = vmatpush1.bf16.msra.mxu0 0
    %487 = vmatprep.subr.bf16.mxu0 0
    %488 = vmatpush1.bf16.msra.mxu0 0
    %489 = vmatprep.subr.bf16.mxu0 0
    %490 = vmatpush1.bf16.msra.mxu0 0
    %491 = vmatprep.subr.bf16.mxu0 0
    %492 = vmatpush1.bf16.msra.mxu0 0
    %493 = vmatprep.subr.bf16.mxu0 0
    %494 = vmatpush1.bf16.msra.mxu0 0
    %495 = vmatprep.mubr.bf16.mxu0 0
    %496 = vmatmul.mubr.bf16.gmra.mrb[0].mxu0 %v462
    %v497 = vpop.f32.mrb[0].mxu0
    %v498 = vadd.f32 0.0, %v497
    %v499 = vpop.f32.mrb[0].mxu0
    %v500 = vpop.f32.mrb[0].mxu0
    %v501 = vpop.f32.mrb[0].mxu0
    %502 = vdwg.mxu0
    %v503 = vadd.f32 %v461, %v498
    %v504 = vtanh.pop %v503
    %505 = vst [vmem:[#allocation2] sm:$0xff] %v504
    // Predicated region
    $region42: #{tpu_custom_call.1} parent=1 // pred_check
      %p506 = pneg %p75
    $region43: #{tpu_custom_call.1} parent=1 // pred_check_branch
      %508 = sbr.rel (%p506) target = $region45
    $region44: #{tpu_custom_call.1} parent=1 // pred_region
      %v509 = vpack.c.bf16 %v504, %v504
      %v510 = vld [vmem:[#allocation9] sm:$0xf]
      %v511 = vld [vmem:[#allocation9 + $0x4] sm:$0xf]
      %v512 = vld [vmem:[#allocation9 + $0x8] sm:$0xf]
      %v513 = vld [vmem:[#allocation9 + $0xc] sm:$0xf]
      %v514 = vld [vmem:[#allocation9 + $0x10] sm:$0xf]
      %v515 = vld [vmem:[#allocation9 + $0x14] sm:$0xf]
      %v516 = vld [vmem:[#allocation9 + $0x18] sm:$0xf]
      %v517 = vld [vmem:[#allocation9 + $0x1c] sm:$0xf]
      %v518 = vld [vmem:[#allocation9 + $0x20] sm:$0xf]
      %v519 = vld [vmem:[#allocation9 + $0x24] sm:$0xf]
      %v520 = vld [vmem:[#allocation9 + $0x28] sm:$0xf]
      %v521 = vld [vmem:[#allocation9 + $0x2c] sm:$0xf]
      %v522 = vld [vmem:[#allocation9 + $0x30] sm:$0xf]
      %v523 = vld [vmem:[#allocation9 + $0x34] sm:$0xf]
      %v524 = vld [vmem:[#allocation9 + $0x38] sm:$0xf]
      %v525 = vld [vmem:[#allocation9 + $0x3c] sm:$0xf]
      %v526 = vld [vmem:[%s4] sm:$0x1]
      %v528 = vlaneseq
      %v529 = vshrl.u32 %v528, 7
      %v530 = vsub.s32 0, %v529
      %v531 = vrot.slane %v526, %v530
      %v549 = vunpack.c.l.b16 %v510
      %v550 = vunpack.c.l.b16 %v511
      %v551 = vunpack.c.l.b16 %v512
      %v552 = vunpack.c.l.b16 %v513
      %v553 = vunpack.c.l.b16 %v514
      %v554 = vunpack.c.l.b16 %v515
      %v555 = vunpack.c.l.b16 %v516
      %v556 = vunpack.c.l.b16 %v517
      %v557 = vunpack.c.l.b16 %v518
      %v558 = vunpack.c.l.b16 %v519
      %v559 = vunpack.c.l.b16 %v520
      %v560 = vunpack.c.l.b16 %v521
      %v561 = vunpack.c.l.b16 %v522
      %v562 = vunpack.c.l.b16 %v523
      %v563 = vunpack.c.l.b16 %v524
      %v564 = vunpack.c.l.b16 %v525
      %v565 = vpack.c.b16 %v550, %v549
      %v566 = vpack.c.b16 %v552, %v551
      %v567 = vpack.c.b16 %v554, %v553
      %v568 = vpack.c.b16 %v556, %v555
      %v569 = vpack.c.b16 %v558, %v557
      %v570 = vpack.c.b16 %v560, %v559
      %v571 = vpack.c.b16 %v562, %v561
      %v572 = vpack.c.b16 %v564, %v563
      %581 = vmatprep.subr.bf16.mxu0 0
      %582 = vmatpush1.bf16.msra.mxu0 %v565
      %583 = vmatprep.subr.bf16.mxu0 0
      %584 = vmatpush1.bf16.msra.mxu0 %v566
      %585 = vmatprep.subr.bf16.mxu0 0
      %586 = vmatpush1.bf16.msra.mxu0 %v567
      %587 = vmatprep.subr.bf16.mxu0 0
      %588 = vmatpush1.bf16.msra.mxu0 %v568
      %589 = vmatprep.subr.bf16.mxu0 0
      %590 = vmatpush1.bf16.msra.mxu0 %v569
      %591 = vmatprep.subr.bf16.mxu0 0
      %592 = vmatpush1.bf16.msra.mxu0 %v570
      %593 = vmatprep.subr.bf16.mxu0 0
      %594 = vmatpush1.bf16.msra.mxu0 %v571
      %595 = vmatprep.subr.bf16.mxu0 0
      %596 = vmatpush1.bf16.msra.mxu0 %v572
      %597 = vmatprep.subr.bf16.mxu0 0
      %598 = vmatpush1.bf16.msra.mxu0 0
      %599 = vmatprep.subr.bf16.mxu0 0
      %600 = vmatpush1.bf16.msra.mxu0 0
      %601 = vmatprep.subr.bf16.mxu0 0
      %602 = vmatpush1.bf16.msra.mxu0 0
      %603 = vmatprep.subr.bf16.mxu0 0
      %604 = vmatpush1.bf16.msra.mxu0 0
      %605 = vmatprep.subr.bf16.mxu0 0
      %606 = vmatpush1.bf16.msra.mxu0 0
      %607 = vmatprep.subr.bf16.mxu0 0
      %608 = vmatpush1.bf16.msra.mxu0 0
      %609 = vmatprep.subr.bf16.mxu0 0
      %610 = vmatpush1.bf16.msra.mxu0 0
      %611 = vmatprep.subr.bf16.mxu0 0
      %612 = vmatpush1.bf16.msra.mxu0 0
      %613 = vmatprep.mubr.bf16.mxu0 0
      %614 = vmatmul.mubr.bf16.gmra.mrb[0].mxu0 %v509
      %v615 = vpop.f32.mrb[0].mxu0
      %v616 = vadd.f32 %v531, %v615
      %v617 = vpop.f32.mrb[0].mxu0
      %v618 = vpop.f32.mrb[0].mxu0
      %v619 = vpop.f32.mrb[0].mxu0
      %620 = vdwg.mxu0
      %621 = vst [vmem:[#allocation11] sm:$0xff] %v616
    $region45: #{tpu_custom_call.1} parent=1 // pred_fallthru
      _
    // Predicated region
    $region46: #{tpu_custom_call.1} parent=1 // pred_check
      _
    $region47: #{tpu_custom_call.1} parent=1 // pred_check_branch
      %623 = sbr.rel (0) target = $region49
    $region48: #{tpu_custom_call.1} parent=1 // pred_region
      %s625 = ssub.s32 128, 128
      %626 = vsyncadd [#allocation5], %s625
      %s628 = sshll.u32 [#allocation11], 4
      %s629 = int_to_ptr.vmem [resolvable:$true] %s628
      %631 = dma.vmem_to_hbm [thread:$0]  %s629, 128, %s5, [#allocation5]
    $region49: #{tpu_custom_call.1} parent=1 // pred_fallthru
      _
    // Predicated region
    $region50: #{tpu_custom_call.1} parent=1 // pred_check
      _
    $region51: #{tpu_custom_call.1} parent=1 // pred_check_branch
      %633 = sbr.rel (0) target = $region53
    $region52: #{tpu_custom_call.1} parent=1 // pred_region
      %634 = dma.done [#allocation5], 128
    $region53: #{tpu_custom_call.1} parent=1 // pred_fallthru
      _
    %635 = vsyncpa [#allocation4], 1
    %636 = vsyncpa [#allocation7], 1
    %637 = vsyncpa [#allocation10], 1
    %638 = vsyncpa [#allocation5], 1

</llo_original>
